<compile_context>
chip_gen: v7x
topology: tpu7x:2x2x1
jax: 0.10.0
libtpu: 0.0.40
codegen_flags: <defaults>
</compile_context>

<pallas_src>
import functools

import jax
import jax.numpy as jnp
from jax.experimental import pallas as pl
from jax.experimental.pallas import tpu as pltpu


def _round_up(a, m):
    return (a + m - 1) // m * m


def _cdiv(a, b):
    return (a + b - 1) // b


# ---------------------------------------------------------------------------
# Kernel bodies
# ---------------------------------------------------------------------------

def _epilogue(h, w2_ref, b2_ref, o_ref, *, nc, m_valid, mask_m_tail):
    """h: (TM, H1) f32, rows ordered [batch-major, context-minor] -> out tile."""
    tm, _ = h.shape
    bb = tm // nc
    if mask_m_tail:
        # Ragged last row tile: zero rows beyond the real B*NC rows so that
        # garbage (possibly NaN/Inf) from the partial-block read cannot leak
        # into real batches through the averaging matmul (0 * NaN == NaN).
        r = jax.lax.broadcasted_iota(jnp.int32, h.shape, 0) + pl.program_id(0) * tm
        h = jnp.where(r < m_valid, h, 0.0)
    # Block-diagonal averaging matrix built in-kernel (no HBM/VMEM operand):
    #   avg[i, j] = 1/nc  iff  i*nc <= j < (i+1)*nc
    bi = jax.lax.broadcasted_iota(jnp.int32, (bb, tm), 0)
    cj = jax.lax.broadcasted_iota(jnp.int32, (bb, tm), 1)
    sel = (cj >= bi * nc) & (cj < bi * nc + nc)
    avg = jnp.where(sel, 1.0 / nc, 0.0).astype(jnp.float32)
    ctx_mean = jnp.dot(avg, h, preferred_element_type=jnp.float32)      # (bb, H1)
    o_ref[...] = (jnp.dot(ctx_mean, w2_ref[...],
                          preferred_element_type=jnp.float32)
                  + b2_ref[...]).astype(o_ref.dtype)


def _fused_kernel(x_ref, w1_ref, b1_ref, w2_ref, b2_ref, o_ref, *,
                  nc, cast_dtype, m_valid, mask_m_tail):
    # Single-K plan: W1 is resident (constant-index block), no accumulator.
    xv = x_ref[...]
    if cast_dtype is not None:
        xv = xv.astype(cast_dtype)       # MXU-rate win, no extra HBM pass over x
    h = jnp.dot(xv, w1_ref[...], preferred_element_type=jnp.float32)
    h = jnp.maximum(h + b1_ref[...], 0.0)
    _epilogue(h, w2_ref, b2_ref, o_ref, nc=nc, m_valid=m_valid,
              mask_m_tail=mask_m_tail)


def _ktiled_kernel(x_ref, w1_ref, b1_ref, w2_ref, b2_ref, o_ref, acc_ref, *,
                   nc, cast_dtype, m_valid, mask_m_tail, d_in, tk, mask_k_tail):
    # K-tiled plan: grid=(m, k), k innermost ("arbitrary"), f32 VMEM accumulator.
    k = pl.program_id(1)

    @pl.when(k == 0)
    def _():
        acc_ref[...] = jnp.zeros_like(acc_ref)

    xv = x_ref[...]
    if mask_k_tail:
        # TK does not divide D_in: W1's K tail is zero-padded, but keep the x
        # tail explicitly zero too so NaN/Inf garbage cannot reach the MXU.
        col = jax.lax.broadcasted_iota(jnp.int32, xv.shape, 1) + k * tk
        xv = jnp.where(col < d_in, xv, jnp.zeros_like(xv))
    if cast_dtype is not None:
        xv = xv.astype(cast_dtype)
    acc_ref[...] += jnp.dot(xv, w1_ref[...], preferred_element_type=jnp.float32)

    @pl.when(k == pl.num_programs(1) - 1)
    def _():
        h = jnp.maximum(acc_ref[...] + b1_ref[...], 0.0)
        _epilogue(h, w2_ref, b2_ref, o_ref, nc=nc, m_valid=m_valid,
                  mask_m_tail=mask_m_tail)


# ---------------------------------------------------------------------------
# Wrapper
# ---------------------------------------------------------------------------

def context_model_forward(x, w1, b1, w2, b2, *, use_bf16_mxu=True,
                          tm_rows=1024, tk_target=1024,
                          w1_resident_bytes=12 * 1024 * 1024):
    """ContextModel forward: x (B, NC, C, H, W) -> (B, V)."""
    B, NC, C, H, W = x.shape
    D_in = C * H * W
    H1 = w1.shape[-1]
    V = w2.shape[-1]
    M = B * NC
    V_pad = _round_up(V, 128)

    # ---- generation-aware VMEM budget --------------------------------------
    try:
        vmem_cap = int(pltpu.get_tpu_info().vmem_capacity_bytes)
    except Exception:
        vmem_cap = 64 * 1024 * 1024          # conservative (v7x-sized) fallback
    vmem_limit = min(int(vmem_cap * 0.75), 100 * 1024 * 1024)
    tile_budget = int(vmem_cap * 0.5)

    # ---- dtype plumbing (x is never copied in HBM) --------------------------
    compute_dtype = jnp.bfloat16 if use_bf16_mxu else jnp.float32
    x_flat = x.reshape(M, D_in)                                # metadata reshape
    cast_dtype = compute_dtype if x_flat.dtype != jnp.dtype(compute_dtype) else None
    xb = x_flat.dtype.itemsize
    w1b = jnp.dtype(compute_dtype).itemsize

    w1c = w1.astype(compute_dtype)                             # small, one-time
    b1c = jnp.asarray(b1, jnp.float32).reshape(1, H1)
    w2p = jnp.asarray(w2, jnp.float32).reshape(H1, V)
    b2p = jnp.asarray(b2, jnp.float32).reshape(1, V)
    if V_pad != V:                                             # lane-dense store
        w2p = jnp.pad(w2p, ((0, 0), (0, V_pad - V)))
        b2p = jnp.pad(b2p, ((0, 0), (0, V_pad - V)))

    # ---- K (= D_in) tiling ---------------------------------------------------
    def choose_k(single):
        if single:
            return D_in, D_in, 1
        cap = max(128, min(tk_target, D_in))
        tk = None
        for t in range((cap // 128) * 128, 0, -128):   # largest 128-mult divisor
            if D_in % t == 0:
                tk = t
                break
        if tk is None:                                 # no aligned divisor
            tk = max(128, min((cap // 128) * 128, _round_up(D_in, 128)))
        d_pad = _round_up(D_in, tk)
        return tk, d_pad, d_pad // tk

    single_k = D_in * H1 * w1b <= w1_resident_bytes    # W1 fully VMEM-resident?
    TK, D_pad, num_k = choose_k(single_k)

    # ---- M (= B*NC rows) tiling ----------------------------------------------
    def footprint(bb):
        tm = bb * NC
        f = (2 * tm * TK * xb            # x tile (double-buffered)
             + 2 * TK * H1 * w1b         # W1 tile
             + 2 * H1 * V_pad * 4        # W2
             + 2 * bb * V_pad * 4        # output tile
             + 4 * (H1 + V_pad))         # biases
        if num_k > 1:
            f += tm * H1 * 4             # f32 accumulator scratch
        return f

    def shrink(bb):
        while footprint(bb) > tile_budget and bb > 8:
            nb = max(8, ((bb // 2) // 8) * 8)
            if nb == bb:
                break
            bb = nb
        return bb

    BB = max(8, (max(tm_rows // max(NC, 1), 8) // 8) * 8)
    if BB >= B:
        BB = B                           # whole batch in one exact tile
    elif B > 8:
        # v7x: keep >= 2 row tiles so both TensorCores get grid work
        # (traded against W1 re-streaming when num_k > 1).
        BB = min(BB, _round_up(_cdiv(B, 2), 8))
    BB = shrink(BB)
    if single_k and footprint(BB) > tile_budget:
        # W1-resident plan does not fit this generation's VMEM: K-tile instead.
        single_k = False
        TK, D_pad, num_k = choose_k(False)
        BB = shrink(BB)

    TM = BB * NC
    num_m = _cdiv(B, BB)
    B_out = num_m * BB
    mask_m_tail = (B_out != B)
    mask_k_tail = (D_pad != D_in)

    if mask_k_tail:                                    # pad only W1's K tail
        w1c = jnp.pad(w1c, ((0, D_pad - D_in), (0, 0)))

    # ---- advisory cost estimate ----------------------------------------------
    flops = (2 * M * D_in * H1                 # x @ W1
             + 2 * B_out * TM * H1             # in-kernel averaging matmul
             + 2 * B_out * H1 * V_pad)         # mean @ W2
    w1_stream = D_pad * H1 * w1b * (num_m if num_k > 1 else 1)
    bytes_accessed = (M * D_in * xb + w1_stream + B_out * V_pad * 4
                      + 4 * (H1 + V_pad + H1 * V_pad))
    cost = pl.CostEstimate(flops=int(flops), transcendentals=0,
                           bytes_accessed=int(bytes_accessed))

    if num_k == 1:
        kernel = functools.partial(_fused_kernel, nc=NC, cast_dtype=cast_dtype,
                                   m_valid=M, mask_m_tail=mask_m_tail)
        grid_spec = pltpu.PrefetchScalarGridSpec(
            num_scalar_prefetch=0,
            grid=(num_m,),
            in_specs=[
                # TODO(synk): sweep pipeline_mode=pl.Buffered(3) on this spec.
                pl.BlockSpec((TM, TK), lambda m: (m, 0)),      # x row tile
                pl.BlockSpec((TK, H1), lambda m: (0, 0)),      # W1 (resident)
                pl.BlockSpec((1, H1), lambda m: (0, 0)),       # b1
                pl.BlockSpec((H1, V_pad), lambda m: (0, 0)),   # W2
                pl.BlockSpec((1, V_pad), lambda m: (0, 0)),    # b2
            ],
            out_specs=pl.BlockSpec((BB, V_pad), lambda m: (m, 0)),
        )
        dims = ("parallel",)
    else:
        kernel = functools.partial(_ktiled_kernel, nc=NC, cast_dtype=cast_dtype,
                                   m_valid=M, mask_m_tail=mask_m_tail,
                                   d_in=D_in, tk=TK, mask_k_tail=mask_k_tail)
        grid_spec = pltpu.PrefetchScalarGridSpec(
            num_scalar_prefetch=0,
            grid=(num_m, num_k),                               # reduction axis last
            in_specs=[
                pl.BlockSpec((TM, TK), lambda m, k: (m, k)),   # x row/K tile
                pl.BlockSpec((TK, H1), lambda m, k: (k, 0)),   # W1 K tile
                pl.BlockSpec((1, H1), lambda m, k: (0, 0)),    # b1
                pl.BlockSpec((H1, V_pad), lambda m, k: (0, 0)),# W2
                pl.BlockSpec((1, V_pad), lambda m, k: (0, 0)), # b2
            ],
            out_specs=pl.BlockSpec((BB, V_pad), lambda m, k: (m, 0)),
            scratch_shapes=[pltpu.VMEM((TM, H1), jnp.float32)],
        )
        dims = ("parallel", "arbitrary")

    out = pl.pallas_call(
        kernel,
        out_shape=jax.ShapeDtypeStruct((B_out, V_pad), jnp.float32),
        grid_spec=grid_spec,
        compiler_params=pltpu.CompilerParams(
            dimension_semantics=dims,
            vmem_limit_bytes=vmem_limit,
        ),
        cost_estimate=cost,
    )(x_flat, w1c, b1c, w2p, b2p)

    return out[:B, :V]


# ---------------------------------------------------------------------------
# Pure-JAX reference (mirrors the PyTorch module with the same inner model)
# ---------------------------------------------------------------------------

def _reference(x, w1, b1, w2, b2):
    B, NC, C, H, W = x.shape
    xf = x.reshape(B * NC, C * H * W)
    h = jnp.maximum(xf @ w1 + jnp.reshape(b1, (1, -1)), 0.0)
    y = h @ w2 + jnp.reshape(b2, (1, -1))
    return jnp.mean(y.reshape(B, NC, -1), axis=1)


if __name__ == "__main__":
    # Small shapes consistent with the forward pass:
    #   batch=2, num_context=4, channels=4, spatial=16x16
    B, NC, C, H, W = 2, 4, 4, 16, 16
    D_in = C * H * W          # 1024
    H1 = 128                  # inner-model hidden width
    V = 64                    # inner-model output vector length

    key = jax.random.PRNGKey(0)
    kx, kw1, kb1, kw2, kb2 = jax.random.split(key, 5)

    x = jax.random.normal(kx, (B, NC, C, H, W), dtype=jnp.float32)
    w1 = jax.random.normal(kw1, (D_in, H1), dtype=jnp.float32) * 0.02
    b1 = jax.random.normal(kb1, (H1,), dtype=jnp.float32) * 0.01
    w2 = jax.random.normal(kw2, (H1, V), dtype=jnp.float32) * 0.02
    b2 = jax.random.normal(kb2, (V,), dtype=jnp.float32) * 0.01

    ref = _reference(x, w1, b1, w2, b2)

    # 1) Default plan: W1 resident (num_k == 1), bf16 MXU inputs, f32 accumulate.
    out = jax.block_until_ready(context_model_forward(x, w1, b1, w2, b2))
    assert out.shape == (B, V)
    assert jnp.allclose(out, ref, atol=2e-2, rtol=2e-2)

    # 2) f32 MXU path (tighter numerics).
    out_f32 = jax.block_until_ready(
        context_model_forward(x, w1, b1, w2, b2, use_bf16_mxu=False))
    assert jnp.allclose(out_f32, ref, atol=5e-3, rtol=5e-3)

    # 3) Force the K-tiled accumulator fallback (grid=(m, k) + VMEM scratch).
    out_kt = jax.block_until_ready(
        context_model_forward(x, w1, b1, w2, b2, use_bf16_mxu=False,
                              tk_target=256, w1_resident_bytes=0))
    assert jnp.allclose(out_kt, ref, atol=5e-3, rtol=5e-3)

    print("KERNEL_OK")
</pallas_src>

<mosaic_0001>
module attributes {stable_mosaic.version = 11 : i64} {
  func.func @_fused_kernel(%arg0: i32, %arg1: memref<8x1024xf32, #tpu.memory_space<vmem>>, %arg2: memref<1024x128xbf16, #tpu.memory_space<vmem>>, %arg3: memref<1x128xf32, #tpu.memory_space<vmem>>, %arg4: memref<128x128xf32, #tpu.memory_space<vmem>>, %arg5: memref<1x128xf32, #tpu.memory_space<vmem>>, %arg6: memref<2x128xf32, #tpu.memory_space<vmem>>) attributes {dimension_semantics = [#tpu.dimension_semantics<parallel>], iteration_bounds = array<i64: 1>, scalar_prefetch = 0 : i64, scratch_operands = 0 : i64, tpu.core_type = #tpu.core_type<tc>, window_params = [{transform_indices = @transform_0, window_bounds = array<i64: 8, 1024>}, {pipeline_mode = #tpu.pipeline_mode<synchronous>, transform_indices = @transform_1, window_bounds = array<i64: 1024, 128>}, {pipeline_mode = #tpu.pipeline_mode<synchronous>, transform_indices = @transform_2, window_bounds = array<i64: 1, 128>}, {pipeline_mode = #tpu.pipeline_mode<synchronous>, transform_indices = @transform_3, window_bounds = array<i64: 128, 128>}, {pipeline_mode = #tpu.pipeline_mode<synchronous>, transform_indices = @transform_4, window_bounds = array<i64: 1, 128>}, {transform_indices = @transform_5, window_bounds = array<i64: 2, 128>}]} {
    %c0 = arith.constant 0 : index
    %c0_0 = arith.constant 0 : index
    %0 = vector.load %arg1[%c0, %c0_0] : memref<8x1024xf32, #tpu.memory_space<vmem>>, vector<8x1024xf32>
    %1 = arith.truncf %0 : vector<8x1024xf32> to vector<8x1024xbf16>
    %c0_1 = arith.constant 0 : index
    %c0_2 = arith.constant 0 : index
    %2 = vector.load %arg2[%c0_1, %c0_2] : memref<1024x128xbf16, #tpu.memory_space<vmem>>, vector<1024x128xbf16>
    %cst = arith.constant dense<0.000000e+00> : vector<8x128xf32>
    %3 = tpu.matmul %1, %2, %cst {dimension_numbers = #tpu.dot_dimension_numbers<[1], [0], [0], [1], [0, 0, 1, 1], [], []>} : vector<8x1024xbf16>, vector<1024x128xbf16>, vector<8x128xf32> -> vector<8x128xf32>
    %c0_3 = arith.constant 0 : index
    %c0_4 = arith.constant 0 : index
    %4 = vector.load %arg3[%c0_3, %c0_4] : memref<1x128xf32, #tpu.memory_space<vmem>>, vector<1x128xf32>
    %5 = vector.broadcast %4 : vector<1x128xf32> to vector<8x128xf32>
    %6 = arith.addf %3, %5 : vector<8x128xf32>
    %cst_5 = arith.constant 0.000000e+00 : f32
    %7 = vector.broadcast %cst_5 : f32 to vector<8x128xf32>
    %8 = arith.maximumf %6, %7 : vector<8x128xf32>
    %9 = tpu.iota {dimensions = array<i32: 0>} : vector<2x8xi32>
    %10 = tpu.iota {dimensions = array<i32: 1>} : vector<2x8xi32>
    %c4_i32 = arith.constant 4 : i32
    %11 = vector.broadcast %c4_i32 : i32 to vector<2x8xi32>
    %12 = arith.muli %9, %11 : vector<2x8xi32>
    %13 = arith.cmpi sge, %10, %12 : vector<2x8xi32>
    %c4_i32_6 = arith.constant 4 : i32
    %14 = vector.broadcast %c4_i32_6 : i32 to vector<2x8xi32>
    %15 = arith.muli %9, %14 : vector<2x8xi32>
    %c4_i32_7 = arith.constant 4 : i32
    %16 = vector.broadcast %c4_i32_7 : i32 to vector<2x8xi32>
    %17 = arith.addi %15, %16 : vector<2x8xi32>
    %18 = arith.cmpi slt, %10, %17 : vector<2x8xi32>
    %19 = arith.andi %13, %18 : vector<2x8xi1>
    %cst_8 = arith.constant 2.500000e-01 : f32
    %cst_9 = arith.constant 0.000000e+00 : f32
    %20 = vector.broadcast %cst_8 : f32 to vector<2x8xf32>
    %21 = vector.broadcast %cst_9 : f32 to vector<2x8xf32>
    %22 = arith.select %19, %20, %21 : vector<2x8xi1>, vector<2x8xf32>
    %cst_10 = arith.constant dense<0.000000e+00> : vector<2x128xf32>
    %23 = tpu.matmul %22, %8, %cst_10 {dimension_numbers = #tpu.dot_dimension_numbers<[1], [0], [0], [1], [0, 0, 1, 1], [], []>} : vector<2x8xf32>, vector<8x128xf32>, vector<2x128xf32> -> vector<2x128xf32>
    %c0_11 = arith.constant 0 : index
    %c0_12 = arith.constant 0 : index
    %24 = vector.load %arg4[%c0_11, %c0_12] : memref<128x128xf32, #tpu.memory_space<vmem>>, vector<128x128xf32>
    %cst_13 = arith.constant dense<0.000000e+00> : vector<2x128xf32>
    %25 = tpu.matmul %23, %24, %cst_13 {dimension_numbers = #tpu.dot_dimension_numbers<[1], [0], [0], [1], [0, 0, 1, 1], [], []>} : vector<2x128xf32>, vector<128x128xf32>, vector<2x128xf32> -> vector<2x128xf32>
    %c0_14 = arith.constant 0 : index
    %c0_15 = arith.constant 0 : index
    %26 = vector.load %arg5[%c0_14, %c0_15] : memref<1x128xf32, #tpu.memory_space<vmem>>, vector<1x128xf32>
    %27 = vector.broadcast %26 : vector<1x128xf32> to vector<2x128xf32>
    %28 = arith.addf %25, %27 : vector<2x128xf32>
    %c0_16 = arith.constant 0 : index
    %c0_17 = arith.constant 0 : index
    %29 = vector.load %arg6[%c0_16, %c0_17] : memref<2x128xf32, #tpu.memory_space<vmem>>, vector<2x128xf32>
    tpu.vector_store %arg6[%c0_16, %c0_17], %28 {strides = array<i32>} : memref<2x128xf32, #tpu.memory_space<vmem>>, vector<2x128xf32>,
    return
  }
  func.func @transform_0(%arg0: i32) -> (i32, i32) {
    %c0_i32 = arith.constant 0 : i32
    %c0_i32_0 = arith.constant 0 : i32
    return %arg0, %c0_i32 : i32, i32
  }
  func.func @transform_1(%arg0: i32) -> (i32, i32) {
    %c0_i32 = arith.constant 0 : i32
    %c0_i32_0 = arith.constant 0 : i32
    %c0_i32_1 = arith.constant 0 : i32
    return %c0_i32, %c0_i32_0 : i32, i32
  }
  func.func @transform_2(%arg0: i32) -> (i32, i32) {
    %c0_i32 = arith.constant 0 : i32
    %c0_i32_0 = arith.constant 0 : i32
    %c0_i32_1 = arith.constant 0 : i32
    return %c0_i32, %c0_i32_0 : i32, i32
  }
  func.func @transform_3(%arg0: i32) -> (i32, i32) {
    %c0_i32 = arith.constant 0 : i32
    %c0_i32_0 = arith.constant 0 : i32
    %c0_i32_1 = arith.constant 0 : i32
    return %c0_i32, %c0_i32_0 : i32, i32
  }
  func.func @transform_4(%arg0: i32) -> (i32, i32) {
    %c0_i32 = arith.constant 0 : i32
    %c0_i32_0 = arith.constant 0 : i32
    %c0_i32_1 = arith.constant 0 : i32
    return %c0_i32, %c0_i32_0 : i32, i32
  }
  func.func @transform_5(%arg0: i32) -> (i32, i32) {
    %c0_i32 = arith.constant 0 : i32
    %c0_i32_0 = arith.constant 0 : i32
    return %arg0, %c0_i32 : i32, i32
  }
}

</mosaic_0001>

<llo_original>
// kernel: tpu_custom_call.1
$region0: #{tpu_custom_call.1}
  #allocation0 [shape = 'u32[]', space=smem, size = 0x4, offset = 0x4, fixed_abs, tag = 'smem constant byte address 0x4 - core index']
  #allocation1 [shape = 'u32[144,128]{1,0:T(1,128)}', space=vmem, size = 0x12000, scoped, tag = 'internal scratch']
  %s0 = inlined_call_operand.hbm [shape: f32[8,1024], index: 0, kind: input, shape index: {}]
  %s1 = inlined_call_operand.hbm [shape: bf16[1024,128], index: 1, kind: input, shape index: {}]
  %s2 = inlined_call_operand.vmem [shape: f32[1,128], index: 2, kind: input, shape index: {}]
  %s3 = inlined_call_operand.hbm [shape: f32[128,128], index: 3, kind: input, shape index: {}]
  %s4 = inlined_call_operand.vmem [shape: f32[1,128], index: 4, kind: input, shape index: {}]
  %s5 = inlined_call_operand.hbm [shape: f32[2,128], index: 5, kind: output, shape index: {}]
  %s6 = sld [smem:[#allocation0]]
  $region42: #{tpu_custom_call.1} parent=0
    _
  %s8 = ssub.s32 1, %s6
  %s9 = scalar_select 0, %s8, %s6
  $region1: #{tpu_custom_call.1} parent=0
    #allocation2 [shape = 'u8[32768]{0}', space=vmem, size = 0x8000, scoped, tag = 'input window, operand 0, single buffered']
    #allocation3 [shape = 's32[1]{0}', space=sflag, size = 0x4, scoped, tag = 'scoped memory for tpu_custom_call.1']
    #allocation4 [shape = 's32[1]{0}', space=sflag, size = 0x4, scoped, tag = 'scoped memory for tpu_custom_call.1']
    #allocation5 [shape = 'u8[262144]{0}', space=vmem, size = 0x40000, scoped, tag = 'input window, operand 1, single buffered']
    #allocation6 [shape = 's32[1]{0}', space=sflag, size = 0x4, scoped, tag = 'scoped memory for tpu_custom_call.1']
    #allocation7 [shape = 'u8[65536]{0}', space=vmem, size = 0x10000, scoped, tag = 'input window, operand 3, single buffered']
    #allocation8 [shape = 'u8[1024]{0}', space=vmem, size = 0x400, scoped, tag = 'output window, operand 0, single buffered']
    %10 = vsyncpa [#allocation3], 0
    %11 = vsyncpa [#allocation6], 0
    %12 = vsyncpa [#allocation4], 0
    // Predicated region
    $region2: #{tpu_custom_call.1} parent=1 // pred_check
      _
    $region3: #{tpu_custom_call.1} parent=1 // pred_check_branch
      %14 = sbr.rel (0) target = $region5
    $region4: #{tpu_custom_call.1} parent=1 // pred_region
      %s16 = ssub.s32 1024, 1024
      %17 = vsyncadd [#allocation3], %s16
      %s19 = sshll.u32 [#allocation2], 4
      %s20 = int_to_ptr.vmem [resolvable:$true] %s19
      %22 = dma.hbm_to_vmem [thread:$0]  %s0, 1024, %s20, [#allocation3]
    $region5: #{tpu_custom_call.1} parent=1 // pred_fallthru
      _
    // Predicated region
    $region6: #{tpu_custom_call.1} parent=1 // pred_check
      _
    $region7: #{tpu_custom_call.1} parent=1 // pred_check_branch
      %24 = sbr.rel (0) target = $region9
    $region8: #{tpu_custom_call.1} parent=1 // pred_region
      %s26 = ssub.s32 8192, 8192
      %27 = vsyncadd [#allocation6], %s26
      %s28 = sshll.u32 [#allocation5], 4
      %s29 = int_to_ptr.vmem [resolvable:$true] %s28
      %34 = dma.hbm_to_vmem [thread:$0]  %s1, 8192, %s29, [#allocation6], 64, 64, 4
    $region9: #{tpu_custom_call.1} parent=1 // pred_fallthru
      _
    // Predicated region
    $region10: #{tpu_custom_call.1} parent=1 // pred_check
      _
    $region11: #{tpu_custom_call.1} parent=1 // pred_check_branch
      %36 = sbr.rel (0) target = $region13
    $region12: #{tpu_custom_call.1} parent=1 // pred_region
      _
    $region13: #{tpu_custom_call.1} parent=1 // pred_fallthru
      _
    // Predicated region
    $region14: #{tpu_custom_call.1} parent=1 // pred_check
      _
    $region15: #{tpu_custom_call.1} parent=1 // pred_check_branch
      %38 = sbr.rel (0) target = $region17
    $region16: #{tpu_custom_call.1} parent=1 // pred_region
      %s40 = ssub.s32 2048, 2048
      %41 = vsyncadd [#allocation6], %s40
      %s42 = sshll.u32 [#allocation7], 4
      %s43 = int_to_ptr.vmem [resolvable:$true] %s42
      %48 = dma.hbm_to_vmem [thread:$0]  %s3, 2048, %s43, [#allocation6], 128, 128, 8
    $region17: #{tpu_custom_call.1} parent=1 // pred_fallthru
      _
    // Predicated region
    $region18: #{tpu_custom_call.1} parent=1 // pred_check
      _
    $region19: #{tpu_custom_call.1} parent=1 // pred_check_branch
      %50 = sbr.rel (0) target = $region21
    $region20: #{tpu_custom_call.1} parent=1 // pred_region
      _
    $region21: #{tpu_custom_call.1} parent=1 // pred_fallthru
      _
    // Predicated region
    $region22: #{tpu_custom_call.1} parent=1 // pred_check
      _
    $region23: #{tpu_custom_call.1} parent=1 // pred_check_branch
      %52 = sbr.rel (0) target = $region25
    $region24: #{tpu_custom_call.1} parent=1 // pred_region
      %53 = dma.done [#allocation3], 1024
    $region25: #{tpu_custom_call.1} parent=1 // pred_fallthru
      _
    // Predicated region
    $region26: #{tpu_custom_call.1} parent=1 // pred_check
      _
    $region27: #{tpu_custom_call.1} parent=1 // pred_check_branch
      %55 = sbr.rel (0) target = $region29
    $region28: #{tpu_custom_call.1} parent=1 // pred_region
      %56 = dma.done [#allocation6], 8192
    $region29: #{tpu_custom_call.1} parent=1 // pred_fallthru
      _
    // Predicated region
    $region30: #{tpu_custom_call.1} parent=1 // pred_check
      _
    $region31: #{tpu_custom_call.1} parent=1 // pred_check_branch
      %58 = sbr.rel (0) target = $region33
    $region32: #{tpu_custom_call.1} parent=1 // pred_region
      %59 = dma.done [#allocation6], 2048
    $region33: #{tpu_custom_call.1} parent=1 // pred_fallthru
      _
    %v61 = vld [vmem:[#allocation2] sm:$0xff]
    %v62 = vld [vmem:[#allocation2 + $0x8] sm:$0xff]
    %v63 = vld [vmem:[#allocation2 + $0x10] sm:$0xff]
    %v64 = vld [vmem:[#allocation2 + $0x18] sm:$0xff]
    %v65 = vld [vmem:[#allocation2 + $0x20] sm:$0xff]
    %v66 = vld [vmem:[#allocation2 + $0x28] sm:$0xff]
    %v67 = vld [vmem:[#allocation2 + $0x30] sm:$0xff]
    %v68 = vld [vmem:[#allocation2 + $0x38] sm:$0xff]
    %v69 = vpack.c.bf16 %v61, %v61
    %v70 = vpack.c.bf16 %v62, %v62
    %v71 = vpack.c.bf16 %v63, %v63
    %v72 = vpack.c.bf16 %v64, %v64
    %v73 = vpack.c.bf16 %v65, %v65
    %v74 = vpack.c.bf16 %v66, %v66
    %v75 = vpack.c.bf16 %v67, %v67
    %v76 = vpack.c.bf16 %v68, %v68
    %v77 = vld [vmem:[#allocation5] sm:$0xf]
    %v78 = vld [vmem:[#allocation5 + $0x4] sm:$0xf]
    %v79 = vld [vmem:[#allocation5 + $0x8] sm:$0xf]
    %v80 = vld [vmem:[#allocation5 + $0xc] sm:$0xf]
    %v81 = vld [vmem:[#allocation5 + $0x10] sm:$0xf]
    %v82 = vld [vmem:[#allocation5 + $0x14] sm:$0xf]
    %v83 = vld [vmem:[#allocation5 + $0x18] sm:$0xf]
    %v84 = vld [vmem:[#allocation5 + $0x1c] sm:$0xf]
    %v85 = vld [vmem:[#allocation5 + $0x20] sm:$0xf]
    %v86 = vld [vmem:[#allocation5 + $0x24] sm:$0xf]
    %v87 = vld [vmem:[#allocation5 + $0x28] sm:$0xf]
    %v88 = vld [vmem:[#allocation5 + $0x2c] sm:$0xf]
    %v89 = vld [vmem:[#allocation5 + $0x30] sm:$0xf]
    %v90 = vld [vmem:[#allocation5 + $0x34] sm:$0xf]
    %v91 = vld [vmem:[#allocation5 + $0x38] sm:$0xf]
    %v92 = vld [vmem:[#allocation5 + $0x3c] sm:$0xf]
    %v93 = vld [vmem:[#allocation5 + $0x40] sm:$0xf]
    %v94 = vld [vmem:[#allocation5 + $0x44] sm:$0xf]
    %v95 = vld [vmem:[#allocation5 + $0x48] sm:$0xf]
    %v96 = vld [vmem:[#allocation5 + $0x4c] sm:$0xf]
    %v97 = vld [vmem:[#allocation5 + $0x50] sm:$0xf]
    %v98 = vld [vmem:[#allocation5 + $0x54] sm:$0xf]
    %v99 = vld [vmem:[#allocation5 + $0x58] sm:$0xf]
    %v100 = vld [vmem:[#allocation5 + $0x5c] sm:$0xf]
    %v101 = vld [vmem:[#allocation5 + $0x60] sm:$0xf]
    %v102 = vld [vmem:[#allocation5 + $0x64] sm:$0xf]
    %v103 = vld [vmem:[#allocation5 + $0x68] sm:$0xf]
    %v104 = vld [vmem:[#allocation5 + $0x6c] sm:$0xf]
    %v105 = vld [vmem:[#allocation5 + $0x70] sm:$0xf]
    %v106 = vld [vmem:[#allocation5 + $0x74] sm:$0xf]
    %v107 = vld [vmem:[#allocation5 + $0x78] sm:$0xf]
    %v108 = vld [vmem:[#allocation5 + $0x7c] sm:$0xf]
    %v109 = vld [vmem:[#allocation5 + $0x80] sm:$0xf]
    %v110 = vld [vmem:[#allocation5 + $0x84] sm:$0xf]
    %v111 = vld [vmem:[#allocation5 + $0x88] sm:$0xf]
    %v112 = vld [vmem:[#allocation5 + $0x8c] sm:$0xf]
    %v113 = vld [vmem:[#allocation5 + $0x90] sm:$0xf]
    %v114 = vld [vmem:[#allocation5 + $0x94] sm:$0xf]
    %v115 = vld [vmem:[#allocation5 + $0x98] sm:$0xf]
    %v116 = vld [vmem:[#allocation5 + $0x9c] sm:$0xf]
    %v117 = vld [vmem:[#allocation5 + $0xa0] sm:$0xf]
    %v118 = vld [vmem:[#allocation5 + $0xa4] sm:$0xf]
    %v119 = vld [vmem:[#allocation5 + $0xa8] sm:$0xf]
    %v120 = vld [vmem:[#allocation5 + $0xac] sm:$0xf]
    %v121 = vld [vmem:[#allocation5 + $0xb0] sm:$0xf]
    %v122 = vld [vmem:[#allocation5 + $0xb4] sm:$0xf]
    %v123 = vld [vmem:[#allocation5 + $0xb8] sm:$0xf]
    %v124 = vld [vmem:[#allocation5 + $0xbc] sm:$0xf]
    %v125 = vld [vmem:[#allocation5 + $0xc0] sm:$0xf]
    %v126 = vld [vmem:[#allocation5 + $0xc4] sm:$0xf]
    %v127 = vld [vmem:[#allocation5 + $0xc8] sm:$0xf]
    %v128 = vld [vmem:[#allocation5 + $0xcc] sm:$0xf]
    %v129 = vld [vmem:[#allocation5 + $0xd0] sm:$0xf]
    %v130 = vld [vmem:[#allocation5 + $0xd4] sm:$0xf]
    %v131 = vld [vmem:[#allocation5 + $0xd8] sm:$0xf]
    %v132 = vld [vmem:[#allocation5 + $0xdc] sm:$0xf]
    %v133 = vld [vmem:[#allocation5 + $0xe0] sm:$0xf]
    %v134 = vld [vmem:[#allocation5 + $0xe4] sm:$0xf]
    %v135 = vld [vmem:[#allocation5 + $0xe8] sm:$0xf]
    %v136 = vld [vmem:[#allocation5 + $0xec] sm:$0xf]
    %v137 = vld [vmem:[#allocation5 + $0xf0] sm:$0xf]
    %v138 = vld [vmem:[#allocation5 + $0xf4] sm:$0xf]
    %v139 = vld [vmem:[#allocation5 + $0xf8] sm:$0xf]
    %v140 = vld [vmem:[#allocation5 + $0xfc] sm:$0xf]
    %v141 = vld [vmem:[#allocation5 + $0x100] sm:$0xf]
    %v142 = vld [vmem:[#allocation5 + $0x104] sm:$0xf]
    %v143 = vld [vmem:[#allocation5 + $0x108] sm:$0xf]
    %v144 = vld [vmem:[#allocation5 + $0x10c] sm:$0xf]
    %v145 = vld [vmem:[#allocation5 + $0x110] sm:$0xf]
    %v146 = vld [vmem:[#allocation5 + $0x114] sm:$0xf]
    %v147 = vld [vmem:[#allocation5 + $0x118] sm:$0xf]
    %v148 = vld [vmem:[#allocation5 + $0x11c] sm:$0xf]
    %v149 = vld [vmem:[#allocation5 + $0x120] sm:$0xf]
    %v150 = vld [vmem:[#allocation5 + $0x124] sm:$0xf]
    %v151 = vld [vmem:[#allocation5 + $0x128] sm:$0xf]
    %v152 = vld [vmem:[#allocation5 + $0x12c] sm:$0xf]
    %v153 = vld [vmem:[#allocation5 + $0x130] sm:$0xf]
    %v154 = vld [vmem:[#allocation5 + $0x134] sm:$0xf]
    %v155 = vld [vmem:[#allocation5 + $0x138] sm:$0xf]
    %v156 = vld [vmem:[#allocation5 + $0x13c] sm:$0xf]
    %v157 = vld [vmem:[#allocation5 + $0x140] sm:$0xf]
    %v158 = vld [vmem:[#allocation5 + $0x144] sm:$0xf]
    %v159 = vld [vmem:[#allocation5 + $0x148] sm:$0xf]
    %v160 = vld [vmem:[#allocation5 + $0x14c] sm:$0xf]
    %v161 = vld [vmem:[#allocation5 + $0x150] sm:$0xf]
    %v162 = vld [vmem:[#allocation5 + $0x154] sm:$0xf]
    %v163 = vld [vmem:[#allocation5 + $0x158] sm:$0xf]
    %v164 = vld [vmem:[#allocation5 + $0x15c] sm:$0xf]
    %v165 = vld [vmem:[#allocation5 + $0x160] sm:$0xf]
    %v166 = vld [vmem:[#allocation5 + $0x164] sm:$0xf]
    %v167 = vld [vmem:[#allocation5 + $0x168] sm:$0xf]
    %v168 = vld [vmem:[#allocation5 + $0x16c] sm:$0xf]
    %v169 = vld [vmem:[#allocation5 + $0x170] sm:$0xf]
    %v170 = vld [vmem:[#allocation5 + $0x174] sm:$0xf]
    %v171 = vld [vmem:[#allocation5 + $0x178] sm:$0xf]
    %v172 = vld [vmem:[#allocation5 + $0x17c] sm:$0xf]
    %v173 = vld [vmem:[#allocation5 + $0x180] sm:$0xf]
    %v174 = vld [vmem:[#allocation5 + $0x184] sm:$0xf]
    %v175 = vld [vmem:[#allocation5 + $0x188] sm:$0xf]
    %v176 = vld [vmem:[#allocation5 + $0x18c] sm:$0xf]
    %v177 = vld [vmem:[#allocation5 + $0x190] sm:$0xf]
    %v178 = vld [vmem:[#allocation5 + $0x194] sm:$0xf]
    %v179 = vld [vmem:[#allocation5 + $0x198] sm:$0xf]
    %v180 = vld [vmem:[#allocation5 + $0x19c] sm:$0xf]
    %v181 = vld [vmem:[#allocation5 + $0x1a0] sm:$0xf]
    %v182 = vld [vmem:[#allocation5 + $0x1a4] sm:$0xf]
    %v183 = vld [vmem:[#allocation5 + $0x1a8] sm:$0xf]
    %v184 = vld [vmem:[#allocation5 + $0x1ac] sm:$0xf]
    %v185 = vld [vmem:[#allocation5 + $0x1b0] sm:$0xf]
    %v186 = vld [vmem:[#allocation5 + $0x1b4] sm:$0xf]
    %v187 = vld [vmem:[#allocation5 + $0x1b8] sm:$0xf]
    %v188 = vld [vmem:[#allocation5 + $0x1bc] sm:$0xf]
    %v189 = vld [vmem:[#allocation5 + $0x1c0] sm:$0xf]
    %v190 = vld [vmem:[#allocation5 + $0x1c4] sm:$0xf]
    %v191 = vld [vmem:[#allocation5 + $0x1c8] sm:$0xf]
    %v192 = vld [vmem:[#allocation5 + $0x1cc] sm:$0xf]
    %v193 = vld [vmem:[#allocation5 + $0x1d0] sm:$0xf]
    %v194 = vld [vmem:[#allocation5 + $0x1d4] sm:$0xf]
    %v195 = vld [vmem:[#allocation5 + $0x1d8] sm:$0xf]
    %v196 = vld [vmem:[#allocation5 + $0x1dc] sm:$0xf]
    %v197 = vld [vmem:[#allocation5 + $0x1e0] sm:$0xf]
    %v198 = vld [vmem:[#allocation5 + $0x1e4] sm:$0xf]
    %v199 = vld [vmem:[#allocation5 + $0x1e8] sm:$0xf]
    %v200 = vld [vmem:[#allocation5 + $0x1ec] sm:$0xf]
    %v201 = vld [vmem:[#allocation5 + $0x1f0] sm:$0xf]
    %v202 = vld [vmem:[#allocation5 + $0x1f4] sm:$0xf]
    %v203 = vld [vmem:[#allocation5 + $0x1f8] sm:$0xf]
    %v204 = vld [vmem:[#allocation5 + $0x1fc] sm:$0xf]
    %v205 = vld [vmem:[%s2] sm:$0x1]
    %v207 = vlaneseq
    %v208 = vshrl.u32 %v207, 7
    %v209 = vsub.s32 0, %v208
    %v210 = vrot.slane %v205, %v209
    %v340 = vunpack.c.l.b16 %v77
    %v341 = vunpack.c.l.b16 %v78
    %v342 = vunpack.c.l.b16 %v79
    %v343 = vunpack.c.l.b16 %v80
    %v344 = vunpack.c.l.b16 %v81
    %v345 = vunpack.c.l.b16 %v82
    %v346 = vunpack.c.l.b16 %v83
    %v347 = vunpack.c.l.b16 %v84
    %v348 = vunpack.c.l.b16 %v85
    %v349 = vunpack.c.l.b16 %v86
    %v350 = vunpack.c.l.b16 %v87
    %v351 = vunpack.c.l.b16 %v88
    %v352 = vunpack.c.l.b16 %v89
    %v353 = vunpack.c.l.b16 %v90
    %v354 = vunpack.c.l.b16 %v91
    %v355 = vunpack.c.l.b16 %v92
    %v356 = vunpack.c.l.b16 %v93
    %v357 = vunpack.c.l.b16 %v94
    %v358 = vunpack.c.l.b16 %v95
    %v359 = vunpack.c.l.b16 %v96
    %v360 = vunpack.c.l.b16 %v97
    %v361 = vunpack.c.l.b16 %v98
    %v362 = vunpack.c.l.b16 %v99
    %v363 = vunpack.c.l.b16 %v100
    %v364 = vunpack.c.l.b16 %v101
    %v365 = vunpack.c.l.b16 %v102
    %v366 = vunpack.c.l.b16 %v103
    %v367 = vunpack.c.l.b16 %v104
    %v368 = vunpack.c.l.b16 %v105
    %v369 = vunpack.c.l.b16 %v106
    %v370 = vunpack.c.l.b16 %v107
    %v371 = vunpack.c.l.b16 %v108
    %v372 = vunpack.c.l.b16 %v109
    %v373 = vunpack.c.l.b16 %v110
    %v374 = vunpack.c.l.b16 %v111
    %v375 = vunpack.c.l.b16 %v112
    %v376 = vunpack.c.l.b16 %v113
    %v377 = vunpack.c.l.b16 %v114
    %v378 = vunpack.c.l.b16 %v115
    %v379 = vunpack.c.l.b16 %v116
    %v380 = vunpack.c.l.b16 %v117
    %v381 = vunpack.c.l.b16 %v118
    %v382 = vunpack.c.l.b16 %v119
    %v383 = vunpack.c.l.b16 %v120
    %v384 = vunpack.c.l.b16 %v121
    %v385 = vunpack.c.l.b16 %v122
    %v386 = vunpack.c.l.b16 %v123
    %v387 = vunpack.c.l.b16 %v124
    %v388 = vunpack.c.l.b16 %v125
    %v389 = vunpack.c.l.b16 %v126
    %v390 = vunpack.c.l.b16 %v127
    %v391 = vunpack.c.l.b16 %v128
    %v392 = vunpack.c.l.b16 %v129
    %v393 = vunpack.c.l.b16 %v130
    %v394 = vunpack.c.l.b16 %v131
    %v395 = vunpack.c.l.b16 %v132
    %v396 = vunpack.c.l.b16 %v133
    %v397 = vunpack.c.l.b16 %v134
    %v398 = vunpack.c.l.b16 %v135
    %v399 = vunpack.c.l.b16 %v136
    %v400 = vunpack.c.l.b16 %v137
    %v401 = vunpack.c.l.b16 %v138
    %v402 = vunpack.c.l.b16 %v139
    %v403 = vunpack.c.l.b16 %v140
    %v404 = vunpack.c.l.b16 %v141
    %v405 = vunpack.c.l.b16 %v142
    %v406 = vunpack.c.l.b16 %v143
    %v407 = vunpack.c.l.b16 %v144
    %v408 = vunpack.c.l.b16 %v145
    %v409 = vunpack.c.l.b16 %v146
    %v410 = vunpack.c.l.b16 %v147
    %v411 = vunpack.c.l.b16 %v148
    %v412 = vunpack.c.l.b16 %v149
    %v413 = vunpack.c.l.b16 %v150
    %v414 = vunpack.c.l.b16 %v151
    %v415 = vunpack.c.l.b16 %v152
    %v416 = vunpack.c.l.b16 %v153
    %v417 = vunpack.c.l.b16 %v154
    %v418 = vunpack.c.l.b16 %v155
    %v419 = vunpack.c.l.b16 %v156
    %v420 = vunpack.c.l.b16 %v157
    %v421 = vunpack.c.l.b16 %v158
    %v422 = vunpack.c.l.b16 %v159
    %v423 = vunpack.c.l.b16 %v160
    %v424 = vunpack.c.l.b16 %v161
    %v425 = vunpack.c.l.b16 %v162
    %v426 = vunpack.c.l.b16 %v163
    %v427 = vunpack.c.l.b16 %v164
    %v428 = vunpack.c.l.b16 %v165
    %v429 = vunpack.c.l.b16 %v166
    %v430 = vunpack.c.l.b16 %v167
    %v431 = vunpack.c.l.b16 %v168
    %v432 = vunpack.c.l.b16 %v169
    %v433 = vunpack.c.l.b16 %v170
    %v434 = vunpack.c.l.b16 %v171
    %v435 = vunpack.c.l.b16 %v172
    %v436 = vunpack.c.l.b16 %v173
    %v437 = vunpack.c.l.b16 %v174
    %v438 = vunpack.c.l.b16 %v175
    %v439 = vunpack.c.l.b16 %v176
    %v440 = vunpack.c.l.b16 %v177
    %v441 = vunpack.c.l.b16 %v178
    %v442 = vunpack.c.l.b16 %v179
    %v443 = vunpack.c.l.b16 %v180
    %v444 = vunpack.c.l.b16 %v181
    %v445 = vunpack.c.l.b16 %v182
    %v446 = vunpack.c.l.b16 %v183
    %v447 = vunpack.c.l.b16 %v184
    %v448 = vunpack.c.l.b16 %v185
    %v449 = vunpack.c.l.b16 %v186
    %v450 = vunpack.c.l.b16 %v187
    %v451 = vunpack.c.l.b16 %v188
    %v452 = vunpack.c.l.b16 %v189
    %v453 = vunpack.c.l.b16 %v190
    %v454 = vunpack.c.l.b16 %v191
    %v455 = vunpack.c.l.b16 %v192
    %v456 = vunpack.c.l.b16 %v193
    %v457 = vunpack.c.l.b16 %v194
    %v458 = vunpack.c.l.b16 %v195
    %v459 = vunpack.c.l.b16 %v196
    %v460 = vunpack.c.l.b16 %v197
    %v461 = vunpack.c.l.b16 %v198
    %v462 = vunpack.c.l.b16 %v199
    %v463 = vunpack.c.l.b16 %v200
    %v464 = vunpack.c.l.b16 %v201
    %v465 = vunpack.c.l.b16 %v202
    %v466 = vunpack.c.l.b16 %v203
    %v467 = vunpack.c.l.b16 %v204
    %v468 = vpack.c.b16 %v341, %v340
    %v469 = vpack.c.b16 %v343, %v342
    %v470 = vpack.c.b16 %v345, %v344
    %v471 = vpack.c.b16 %v347, %v346
    %v472 = vpack.c.b16 %v349, %v348
    %v473 = vpack.c.b16 %v351, %v350
    %v474 = vpack.c.b16 %v353, %v352
    %v475 = vpack.c.b16 %v355, %v354
    %v476 = vpack.c.b16 %v357, %v356
    %v477 = vpack.c.b16 %v359, %v358
    %v478 = vpack.c.b16 %v361, %v360
    %v479 = vpack.c.b16 %v363, %v362
    %v480 = vpack.c.b16 %v365, %v364
    %v481 = vpack.c.b16 %v367, %v366
    %v482 = vpack.c.b16 %v369, %v368
    %v483 = vpack.c.b16 %v371, %v370
    %v484 = vpack.c.b16 %v373, %v372
    %v485 = vpack.c.b16 %v375, %v374
    %v486 = vpack.c.b16 %v377, %v376
    %v487 = vpack.c.b16 %v379, %v378
    %v488 = vpack.c.b16 %v381, %v380
    %v489 = vpack.c.b16 %v383, %v382
    %v490 = vpack.c.b16 %v385, %v384
    %v491 = vpack.c.b16 %v387, %v386
    %v492 = vpack.c.b16 %v389, %v388
    %v493 = vpack.c.b16 %v391, %v390
    %v494 = vpack.c.b16 %v393, %v392
    %v495 = vpack.c.b16 %v395, %v394
    %v496 = vpack.c.b16 %v397, %v396
    %v497 = vpack.c.b16 %v399, %v398
    %v498 = vpack.c.b16 %v401, %v400
    %v499 = vpack.c.b16 %v403, %v402
    %v500 = vpack.c.b16 %v405, %v404
    %v501 = vpack.c.b16 %v407, %v406
    %v502 = vpack.c.b16 %v409, %v408
    %v503 = vpack.c.b16 %v411, %v410
    %v504 = vpack.c.b16 %v413, %v412
    %v505 = vpack.c.b16 %v415, %v414
    %v506 = vpack.c.b16 %v417, %v416
    %v507 = vpack.c.b16 %v419, %v418
    %v508 = vpack.c.b16 %v421, %v420
    %v509 = vpack.c.b16 %v423, %v422
    %v510 = vpack.c.b16 %v425, %v424
    %v511 = vpack.c.b16 %v427, %v426
    %v512 = vpack.c.b16 %v429, %v428
    %v513 = vpack.c.b16 %v431, %v430
    %v514 = vpack.c.b16 %v433, %v432
    %v515 = vpack.c.b16 %v435, %v434
    %v516 = vpack.c.b16 %v437, %v436
    %v517 = vpack.c.b16 %v439, %v438
    %v518 = vpack.c.b16 %v441, %v440
    %v519 = vpack.c.b16 %v443, %v442
    %v520 = vpack.c.b16 %v445, %v444
    %v521 = vpack.c.b16 %v447, %v446
    %v522 = vpack.c.b16 %v449, %v448
    %v523 = vpack.c.b16 %v451, %v450
    %v524 = vpack.c.b16 %v453, %v452
    %v525 = vpack.c.b16 %v455, %v454
    %v526 = vpack.c.b16 %v457, %v456
    %v527 = vpack.c.b16 %v459, %v458
    %v528 = vpack.c.b16 %v461, %v460
    %v529 = vpack.c.b16 %v463, %v462
    %v530 = vpack.c.b16 %v465, %v464
    %v531 = vpack.c.b16 %v467, %v466
    %596 = vmatprep.subr.bf16.mxu0 0
    %597 = vmatpush1.bf16.msra.mxu0 %v468
    %598 = vmatprep.subr.bf16.mxu0 0
    %599 = vmatpush1.bf16.msra.mxu0 %v469
    %600 = vmatprep.subr.bf16.mxu0 0
    %601 = vmatpush1.bf16.msra.mxu0 %v470
    %602 = vmatprep.subr.bf16.mxu0 0
    %603 = vmatpush1.bf16.msra.mxu0 %v471
    %604 = vmatprep.subr.bf16.mxu0 0
    %605 = vmatpush1.bf16.msra.mxu0 %v472
    %606 = vmatprep.subr.bf16.mxu0 0
    %607 = vmatpush1.bf16.msra.mxu0 %v473
    %608 = vmatprep.subr.bf16.mxu0 0
    %609 = vmatpush1.bf16.msra.mxu0 %v474
    %610 = vmatprep.subr.bf16.mxu0 0
    %611 = vmatpush1.bf16.msra.mxu0 %v475
    %612 = vmatprep.subr.bf16.mxu0 0
    %613 = vmatpush1.bf16.msra.mxu0 %v476
    %614 = vmatprep.subr.bf16.mxu0 0
    %615 = vmatpush1.bf16.msra.mxu0 %v477
    %616 = vmatprep.subr.bf16.mxu0 0
    %617 = vmatpush1.bf16.msra.mxu0 %v478
    %618 = vmatprep.subr.bf16.mxu0 0
    %619 = vmatpush1.bf16.msra.mxu0 %v479
    %620 = vmatprep.subr.bf16.mxu0 0
    %621 = vmatpush1.bf16.msra.mxu0 %v480
    %622 = vmatprep.subr.bf16.mxu0 0
    %623 = vmatpush1.bf16.msra.mxu0 %v481
    %624 = vmatprep.subr.bf16.mxu0 0
    %625 = vmatpush1.bf16.msra.mxu0 %v482
    %626 = vmatprep.subr.bf16.mxu0 0
    %627 = vmatpush1.bf16.msra.mxu0 %v483
    %628 = vmatprep.mubr.bf16.mxu0 %v70
    %629 = vmatmul.mubr.bf16.gmra.mrb[0].mxu0 %v69
    %v630 = vpop.f32.mrb[0].mxu0
    %v631 = vadd.f32 %v210, %v630
    %v632 = vpop.f32.mrb[0].mxu0
    %v633 = vpop.f32.mrb[0].mxu0
    %v634 = vpop.f32.mrb[0].mxu0
    %635 = vdwg.mxu0
    %636 = vmatprep.subr.bf16.mxu0 0
    %637 = vmatpush1.bf16.msra.mxu0 %v484
    %638 = vmatprep.subr.bf16.mxu0 0
    %639 = vmatpush1.bf16.msra.mxu0 %v485
    %640 = vmatprep.subr.bf16.mxu0 0
    %641 = vmatpush1.bf16.msra.mxu0 %v486
    %642 = vmatprep.subr.bf16.mxu0 0
    %643 = vmatpush1.bf16.msra.mxu0 %v487
    %644 = vmatprep.subr.bf16.mxu0 0
    %645 = vmatpush1.bf16.msra.mxu0 %v488
    %646 = vmatprep.subr.bf16.mxu0 0
    %647 = vmatpush1.bf16.msra.mxu0 %v489
    %648 = vmatprep.subr.bf16.mxu0 0
    %649 = vmatpush1.bf16.msra.mxu0 %v490
    %650 = vmatprep.subr.bf16.mxu0 0
    %651 = vmatpush1.bf16.msra.mxu0 %v491
    %652 = vmatprep.subr.bf16.mxu0 0
    %653 = vmatpush1.bf16.msra.mxu0 %v492
    %654 = vmatprep.subr.bf16.mxu0 0
    %655 = vmatpush1.bf16.msra.mxu0 %v493
    %656 = vmatprep.subr.bf16.mxu0 0
    %657 = vmatpush1.bf16.msra.mxu0 %v494
    %658 = vmatprep.subr.bf16.mxu0 0
    %659 = vmatpush1.bf16.msra.mxu0 %v495
    %660 = vmatprep.subr.bf16.mxu0 0
    %661 = vmatpush1.bf16.msra.mxu0 %v496
    %662 = vmatprep.subr.bf16.mxu0 0
    %663 = vmatpush1.bf16.msra.mxu0 %v497
    %664 = vmatprep.subr.bf16.mxu0 0
    %665 = vmatpush1.bf16.msra.mxu0 %v498
    %666 = vmatprep.subr.bf16.mxu0 0
    %667 = vmatpush1.bf16.msra.mxu0 %v499
    %668 = vmatprep.mubr.bf16.mxu0 %v72
    %669 = vmatmul.mubr.bf16.gmra.mrb[0].mxu0 %v71
    %v670 = vpop.f32.mrb[0].mxu0
    %v671 = vadd.f32 %v631, %v670
    %v672 = vpop.f32.mrb[0].mxu0
    %v673 = vpop.f32.mrb[0].mxu0
    %v674 = vpop.f32.mrb[0].mxu0
    %675 = vdwg.mxu0
    %676 = vmatprep.subr.bf16.mxu0 0
    %677 = vmatpush1.bf16.msra.mxu0 %v500
    %678 = vmatprep.subr.bf16.mxu0 0
    %679 = vmatpush1.bf16.msra.mxu0 %v501
    %680 = vmatprep.subr.bf16.mxu0 0
    %681 = vmatpush1.bf16.msra.mxu0 %v502
    %682 = vmatprep.subr.bf16.mxu0 0
    %683 = vmatpush1.bf16.msra.mxu0 %v503
    %684 = vmatprep.subr.bf16.mxu0 0
    %685 = vmatpush1.bf16.msra.mxu0 %v504
    %686 = vmatprep.subr.bf16.mxu0 0
    %687 = vmatpush1.bf16.msra.mxu0 %v505
    %688 = vmatprep.subr.bf16.mxu0 0
    %689 = vmatpush1.bf16.msra.mxu0 %v506
    %690 = vmatprep.subr.bf16.mxu0 0
    %691 = vmatpush1.bf16.msra.mxu0 %v507
    %692 = vmatprep.subr.bf16.mxu0 0
    %693 = vmatpush1.bf16.msra.mxu0 %v508
    %694 = vmatprep.subr.bf16.mxu0 0
    %695 = vmatpush1.bf16.msra.mxu0 %v509
    %696 = vmatprep.subr.bf16.mxu0 0
    %697 = vmatpush1.bf16.msra.mxu0 %v510
    %698 = vmatprep.subr.bf16.mxu0 0
    %699 = vmatpush1.bf16.msra.mxu0 %v511
    %700 = vmatprep.subr.bf16.mxu0 0
    %701 = vmatpush1.bf16.msra.mxu0 %v512
    %702 = vmatprep.subr.bf16.mxu0 0
    %703 = vmatpush1.bf16.msra.mxu0 %v513
    %704 = vmatprep.subr.bf16.mxu0 0
    %705 = vmatpush1.bf16.msra.mxu0 %v514
    %706 = vmatprep.subr.bf16.mxu0 0
    %707 = vmatpush1.bf16.msra.mxu0 %v515
    %708 = vmatprep.mubr.bf16.mxu0 %v74
    %709 = vmatmul.mubr.bf16.gmra.mrb[0].mxu0 %v73
    %v710 = vpop.f32.mrb[0].mxu0
    %v711 = vadd.f32 %v671, %v710
    %v712 = vpop.f32.mrb[0].mxu0
    %v713 = vpop.f32.mrb[0].mxu0
    %v714 = vpop.f32.mrb[0].mxu0
    %715 = vdwg.mxu0
    %716 = vmatprep.subr.bf16.mxu0 0
    %717 = vmatpush1.bf16.msra.mxu0 %v516
    %718 = vmatprep.subr.bf16.mxu0 0
    %719 = vmatpush1.bf16.msra.mxu0 %v517
    %720 = vmatprep.subr.bf16.mxu0 0
    %721 = vmatpush1.bf16.msra.mxu0 %v518
    %722 = vmatprep.subr.bf16.mxu0 0
    %723 = vmatpush1.bf16.msra.mxu0 %v519
    %724 = vmatprep.subr.bf16.mxu0 0
    %725 = vmatpush1.bf16.msra.mxu0 %v520
    %726 = vmatprep.subr.bf16.mxu0 0
    %727 = vmatpush1.bf16.msra.mxu0 %v521
    %728 = vmatprep.subr.bf16.mxu0 0
    %729 = vmatpush1.bf16.msra.mxu0 %v522
    %730 = vmatprep.subr.bf16.mxu0 0
    %731 = vmatpush1.bf16.msra.mxu0 %v523
    %732 = vmatprep.subr.bf16.mxu0 0
    %733 = vmatpush1.bf16.msra.mxu0 %v524
    %734 = vmatprep.subr.bf16.mxu0 0
    %735 = vmatpush1.bf16.msra.mxu0 %v525
    %736 = vmatprep.subr.bf16.mxu0 0
    %737 = vmatpush1.bf16.msra.mxu0 %v526
    %738 = vmatprep.subr.bf16.mxu0 0
    %739 = vmatpush1.bf16.msra.mxu0 %v527
    %740 = vmatprep.subr.bf16.mxu0 0
    %741 = vmatpush1.bf16.msra.mxu0 %v528
    %742 = vmatprep.subr.bf16.mxu0 0
    %743 = vmatpush1.bf16.msra.mxu0 %v529
    %744 = vmatprep.subr.bf16.mxu0 0
    %745 = vmatpush1.bf16.msra.mxu0 %v530
    %746 = vmatprep.subr.bf16.mxu0 0
    %747 = vmatpush1.bf16.msra.mxu0 %v531
    %748 = vmatprep.mubr.bf16.mxu0 %v76
    %749 = vmatmul.mubr.bf16.gmra.mrb[0].mxu0 %v75
    %v750 = vpop.f32.mrb[0].mxu0
    %v751 = vadd.f32 %v711, %v750
    %v752 = vpop.f32.mrb[0].mxu0
    %v753 = vpop.f32.mrb[0].mxu0
    %v754 = vpop.f32.mrb[0].mxu0
    %755 = vdwg.mxu0
    %v756 = vmax.f32 %v751, 0.0
    %v757 = vlaneseq
    %v758 = vshrl.u32 %v757, 7
    %v759 = vlaneseq
    %v760 = vand.u32 %v759, 127
    %v761 = vmul.u32 %v758, 4
    %vm762 = vcmp.ge.s32.totalorder %v760, %v761
    %v763 = vadd.s32 %v761, 4
    %vm764 = vcmp.lt.s32.totalorder %v760, %v763
    %vm765 = vmand %vm762, %vm764
    %v766 = vsel %vm765, 0.25, 0.0
    %vm767 = vcmask 64512
    %v769 = vsel %vm767, %v766, 0
    %771 = vmatprep.subr.mxu0 0.0
    %772 = vmatpush1.msra.mxu0 %v756
    %773 = vmatprep.subr.mxu0 0.0
    %774 = vmatpush1.msra.mxu0 0.0
    %775 = vmatprep.subr.mxu0 0.0
    %776 = vmatpush1.msra.mxu0 0.0
    %777 = vmatprep.subr.mxu0 0.0
    %778 = vmatpush1.msra.mxu0 0.0
    %779 = vmatprep.subr.mxu0 0.0
    %780 = vmatpush1.msra.mxu0 0.0
    %781 = vmatprep.subr.mxu0 0.0
    %782 = vmatpush1.msra.mxu0 0.0
    %783 = vmatprep.subr.mxu0 0.0
    %784 = vmatpush1.msra.mxu0 0.0
    %785 = vmatprep.subr.mxu0 0.0
    %786 = vmatpush1.msra.mxu0 0.0
    %787 = vmatprep.subr.mxu0 0.0
    %788 = vmatpush1.msra.mxu0 0.0
    %789 = vmatprep.subr.mxu0 0.0
    %790 = vmatpush1.msra.mxu0 0.0
    %791 = vmatprep.subr.mxu0 0.0
    %792 = vmatpush1.msra.mxu0 0.0
    %793 = vmatprep.subr.mxu0 0.0
    %794 = vmatpush1.msra.mxu0 0.0
    %795 = vmatprep.subr.mxu0 0.0
    %796 = vmatpush1.msra.mxu0 0.0
    %797 = vmatprep.subr.mxu0 0.0
    %798 = vmatpush1.msra.mxu0 0.0
    %799 = vmatprep.subr.mxu0 0.0
    %800 = vmatpush1.msra.mxu0 0.0
    %801 = vmatprep.subr.mxu0 0.0
    %802 = vmatpush1.msra.mxu0 0.0
    %803 = vmatprep.subr.mxu0 0.0
    %804 = vmatpush1.msra.mxu0 0.0
    %805 = vmatprep.subr.mxu0 0.0
    %806 = vmatpush1.msra.mxu0 0.0
    %807 = vmatprep.subr.mxu0 0.0
    %808 = vmatpush1.msra.mxu0 0.0
    %809 = vmatprep.subr.mxu0 0.0
    %810 = vmatpush1.msra.mxu0 0.0
    %811 = vmatprep.subr.mxu0 0.0
    %812 = vmatpush1.msra.mxu0 0.0
    %813 = vmatprep.subr.mxu0 0.0
    %814 = vmatpush1.msra.mxu0 0.0
    %815 = vmatprep.subr.mxu0 0.0
    %816 = vmatpush1.msra.mxu0 0.0
    %817 = vmatprep.subr.mxu0 0.0
    %818 = vmatpush1.msra.mxu0 0.0
    %819 = vmatprep.subr.mxu0 0.0
    %820 = vmatpush1.msra.mxu0 0.0
    %821 = vmatprep.subr.mxu0 0.0
    %822 = vmatpush1.msra.mxu0 0.0
    %823 = vmatprep.subr.mxu0 0.0
    %824 = vmatpush1.msra.mxu0 0.0
    %825 = vmatprep.subr.mxu0 0.0
    %826 = vmatpush1.msra.mxu0 0.0
    %827 = vmatprep.subr.mxu0 0.0
    %828 = vmatpush1.msra.mxu0 0.0
    %829 = vmatprep.subr.mxu0 0.0
    %830 = vmatpush1.msra.mxu0 0.0
    %831 = vmatprep.subr.mxu0 0.0
    %832 = vmatpush1.msra.mxu0 0.0
    %833 = vmatprep.subr.mxu0 0.0
    %834 = vmatpush1.msra.mxu0 0.0
    %835 = vmatprep.mubr.f32.mxu0 0.0
    %836 = vmatmul.mubr.f32.gmra.mrb[0].mxu0 %v769
    %v837 = vpop.f32.mrb[0].mxu0
    %v838 = vadd.f32 0.0, %v837
    %v839 = vpop.f32.mrb[0].mxu0
    %840 = vdwg.mxu0
    %v841 = vld [vmem:[#allocation7] sm:$0xff]
    %v842 = vld [vmem:[#allocation7 + $0x8] sm:$0xff]
    %v843 = vld [vmem:[#allocation7 + $0x10] sm:$0xff]
    %v844 = vld [vmem:[#allocation7 + $0x18] sm:$0xff]
    %v845 = vld [vmem:[#allocation7 + $0x20] sm:$0xff]
    %v846 = vld [vmem:[#allocation7 + $0x28] sm:$0xff]
    %v847 = vld [vmem:[#allocation7 + $0x30] sm:$0xff]
    %v848 = vld [vmem:[#allocation7 + $0x38] sm:$0xff]
    %v849 = vld [vmem:[#allocation7 + $0x40] sm:$0xff]
    %v850 = vld [vmem:[#allocation7 + $0x48] sm:$0xff]
    %v851 = vld [vmem:[#allocation7 + $0x50] sm:$0xff]
    %v852 = vld [vmem:[#allocation7 + $0x58] sm:$0xff]
    %v853 = vld [vmem:[#allocation7 + $0x60] sm:$0xff]
    %v854 = vld [vmem:[#allocation7 + $0x68] sm:$0xff]
    %v855 = vld [vmem:[#allocation7 + $0x70] sm:$0xff]
    %v856 = vld [vmem:[#allocation7 + $0x78] sm:$0xff]
    %v857 = vld [vmem:[%s4] sm:$0x1]
    %v859 = vlaneseq
    %v860 = vshrl.u32 %v859, 7
    %v861 = vsub.s32 0, %v860
    %v862 = vrot.slane %v857, %v861
    %864 = vmatprep.subr.mxu0 0.0
    %865 = vmatpush1.msra.mxu0 %v841
    %866 = vmatprep.subr.mxu0 0.0
    %867 = vmatpush1.msra.mxu0 %v842
    %868 = vmatprep.subr.mxu0 0.0
    %869 = vmatpush1.msra.mxu0 %v843
    %870 = vmatprep.subr.mxu0 0.0
    %871 = vmatpush1.msra.mxu0 %v844
    %872 = vmatprep.subr.mxu0 0.0
    %873 = vmatpush1.msra.mxu0 %v845
    %874 = vmatprep.subr.mxu0 0.0
    %875 = vmatpush1.msra.mxu0 %v846
    %876 = vmatprep.subr.mxu0 0.0
    %877 = vmatpush1.msra.mxu0 %v847
    %878 = vmatprep.subr.mxu0 0.0
    %879 = vmatpush1.msra.mxu0 %v848
    %880 = vmatprep.subr.mxu0 0.0
    %881 = vmatpush1.msra.mxu0 %v849
    %882 = vmatprep.subr.mxu0 0.0
    %883 = vmatpush1.msra.mxu0 %v850
    %884 = vmatprep.subr.mxu0 0.0
    %885 = vmatpush1.msra.mxu0 %v851
    %886 = vmatprep.subr.mxu0 0.0
    %887 = vmatpush1.msra.mxu0 %v852
    %888 = vmatprep.subr.mxu0 0.0
    %889 = vmatpush1.msra.mxu0 %v853
    %890 = vmatprep.subr.mxu0 0.0
    %891 = vmatpush1.msra.mxu0 %v854
    %892 = vmatprep.subr.mxu0 0.0
    %893 = vmatpush1.msra.mxu0 %v855
    %894 = vmatprep.subr.mxu0 0.0
    %895 = vmatpush1.msra.mxu0 %v856
    %896 = vmatprep.subr.mxu0 0.0
    %897 = vmatpush1.msra.mxu0 0.0
    %898 = vmatprep.subr.mxu0 0.0
    %899 = vmatpush1.msra.mxu0 0.0
    %900 = vmatprep.subr.mxu0 0.0
    %901 = vmatpush1.msra.mxu0 0.0
    %902 = vmatprep.subr.mxu0 0.0
    %903 = vmatpush1.msra.mxu0 0.0
    %904 = vmatprep.subr.mxu0 0.0
    %905 = vmatpush1.msra.mxu0 0.0
    %906 = vmatprep.subr.mxu0 0.0
    %907 = vmatpush1.msra.mxu0 0.0
    %908 = vmatprep.subr.mxu0 0.0
    %909 = vmatpush1.msra.mxu0 0.0
    %910 = vmatprep.subr.mxu0 0.0
    %911 = vmatpush1.msra.mxu0 0.0
    %912 = vmatprep.subr.mxu0 0.0
    %913 = vmatpush1.msra.mxu0 0.0
    %914 = vmatprep.subr.mxu0 0.0
    %915 = vmatpush1.msra.mxu0 0.0
    %916 = vmatprep.subr.mxu0 0.0
    %917 = vmatpush1.msra.mxu0 0.0
    %918 = vmatprep.subr.mxu0 0.0
    %919 = vmatpush1.msra.mxu0 0.0
    %920 = vmatprep.subr.mxu0 0.0
    %921 = vmatpush1.msra.mxu0 0.0
    %922 = vmatprep.subr.mxu0 0.0
    %923 = vmatpush1.msra.mxu0 0.0
    %924 = vmatprep.subr.mxu0 0.0
    %925 = vmatpush1.msra.mxu0 0.0
    %926 = vmatprep.subr.mxu0 0.0
    %927 = vmatpush1.msra.mxu0 0.0
    %928 = vmatprep.mubr.f32.mxu0 0.0
    %929 = vmatmul.mubr.f32.gmra.mrb[0].mxu0 %v838
    %v930 = vpop.f32.mrb[0].mxu0
    %v931 = vadd.f32 %v862, %v930
    %v932 = vpop.f32.mrb[0].mxu0
    %933 = vdwg.mxu0
    %934 = vst [vmem:[#allocation8] sm:$0x3] %v931
    // Predicated region
    $region34: #{tpu_custom_call.1} parent=1 // pred_check
      _
    $region35: #{tpu_custom_call.1} parent=1 // pred_check_branch
      %936 = sbr.rel (0) target = $region37
    $region36: #{tpu_custom_call.1} parent=1 // pred_region
      %s938 = ssub.s32 32, 32
      %939 = vsyncadd [#allocation4], %s938
      %s941 = sshll.u32 [#allocation8], 4
      %s942 = int_to_ptr.vmem [resolvable:$true] %s941
      %944 = dma.vmem_to_hbm [thread:$0]  %s942, 32, %s5, [#allocation4]
    $region37: #{tpu_custom_call.1} parent=1 // pred_fallthru
      _
    // Predicated region
    $region38: #{tpu_custom_call.1} parent=1 // pred_check
      _
    $region39: #{tpu_custom_call.1} parent=1 // pred_check_branch
      %946 = sbr.rel (0) target = $region41
    $region40: #{tpu_custom_call.1} parent=1 // pred_region
      %947 = dma.done [#allocation4], 32
    $region41: #{tpu_custom_call.1} parent=1 // pred_fallthru
      _
    %948 = vsyncpa [#allocation3], 1
    %949 = vsyncpa [#allocation6], 1
    %950 = vsyncpa [#allocation4], 1

</llo_original>
